<compile_context>
chip_gen: v5e
topology: v5e:2x2
jax: 0.10.0
libtpu: 0.0.40
codegen_flags: <defaults>
</compile_context>

<pallas_src>
import functools

import jax
import jax.numpy as jnp
from jax.experimental import pallas as pl
from jax.experimental.pallas import tpu as pltpu

EPS = 1e-5
LANE = 128


def _round_up(n, m):
    return ((n + m - 1) // m) * m


def _bn_train(h, gamma, beta, inv_batch):
    """Training-mode BatchNorm1d, single reduction pass.

    var = E[h^2] - E[h]^2 (biased). One (sum, sumsq) sublane-reduction pass
    instead of mean -> subtract -> square -> mean. Slightly less numerically
    stable than the two-pass form, so var is clamped at 0; fine in f32 here.
    """
    s = jnp.sum(h, axis=0, keepdims=True)
    ss = jnp.sum(h * h, axis=0, keepdims=True)
    mean = s * inv_batch
    var = jnp.maximum(ss * inv_batch - mean * mean, 0.0)
    # fold rsqrt*gamma at (1, P) before broadcasting to (B, P)
    scale = jax.lax.rsqrt(var + EPS) * gamma
    return (h - mean) * scale + beta


def mlp_kernel(x_ref, w_ref, p_ref, o_ref, *, inv_batch):
    """Fused Linear->BN->ReLU ->Linear->BN->ReLU ->Linear.

    x_ref: (B, in_dim)  bf16  activations (K unpadded; MXU pads K internally)
    w_ref: (3, P, P)    bf16  stacked zero-padded weights [w1, w2, w3]
    p_ref: (8, P)       f32   packed per-feature vectors:
                              row0 g1, row1 be1, row2 g2, row3 be2, row4 b3
    o_ref: (B, P)       f32   lane-dense padded output

    Padded columns stay exactly 0 through every layer because the padded
    gamma/beta/bias slab entries are 0 (var=0 -> rsqrt(eps) is killed by
    gamma=0); padded weight rows then contribute nothing to the next matmul.
    """
    in_dim = x_ref.shape[1]
    x = x_ref[...]

    # layer1: Linear (bias folded away by training-mode BN) -> BN -> ReLU
    h = jnp.dot(x, w_ref[0, :in_dim, :], preferred_element_type=jnp.float32)
    h = jnp.maximum(_bn_train(h, p_ref[0:1, :], p_ref[1:2, :], inv_batch), 0.0)

    # layer2: Linear -> BN -> ReLU  (bf16 operands, f32 accumulate; BN in f32)
    h = jnp.dot(h.astype(jnp.bfloat16), w_ref[1],
                preferred_element_type=jnp.float32)
    h = jnp.maximum(_bn_train(h, p_ref[2:3, :], p_ref[3:4, :], inv_batch), 0.0)

    # layer3: Linear + bias (no BN after it, so b3 is kept)
    out = jnp.dot(h.astype(jnp.bfloat16), w_ref[2],
                  preferred_element_type=jnp.float32)
    o_ref[...] = out + p_ref[4:5, :]


def prepare_params(params, in_dim, h1, h2, out_dim):
    """One-time (init-time) packing — hoisted out of the per-call path.

    Returns:
      w_stack: (3, P, P) bf16 — zero-padded, stacked [w1, w2, w3]
      slab:    (8, P)    f32  — rows [g1, be1, g2, be2, b3], zero-padded.
    b1/b2 are accepted in `params` but intentionally unused: training-mode
    BatchNorm subtracts the batch mean, cancelling the Linear bias exactly.
    """
    P = _round_up(max(in_dim, h1, h2, out_dim), LANE)
    bf16, f32 = jnp.bfloat16, jnp.float32

    w_stack = jnp.zeros((3, P, P), bf16)
    w_stack = w_stack.at[0, :in_dim, :h1].set(params["w1"].astype(bf16))
    w_stack = w_stack.at[1, :h1, :h2].set(params["w2"].astype(bf16))
    w_stack = w_stack.at[2, :h2, :out_dim].set(params["w3"].astype(bf16))

    # Padded slab entries MUST stay zero (see kernel docstring).
    slab = jnp.zeros((8, P), f32)
    slab = slab.at[0, :h1].set(params["g1"].reshape(-1).astype(f32))
    slab = slab.at[1, :h1].set(params["be1"].reshape(-1).astype(f32))
    slab = slab.at[2, :h2].set(params["g2"].reshape(-1).astype(f32))
    slab = slab.at[3, :h2].set(params["be2"].reshape(-1).astype(f32))
    slab = slab.at[4, :out_dim].set(params["b3"].reshape(-1).astype(f32))

    return jax.device_put(w_stack), jax.device_put(slab)


@functools.partial(jax.jit, static_argnames=("out_dim",))
def net_forward(x, w_stack, slab, *, out_dim):
    """Jitted forward: bf16 cast + single pallas_call + output slice."""
    B = x.shape[0]
    P = w_stack.shape[-1]
    kernel = functools.partial(mlp_kernel, inv_batch=1.0 / B)
    vmem = pl.BlockSpec(memory_space=pltpu.MemorySpace.VMEM)

    out_padded = pl.pallas_call(
        kernel,
        out_shape=jax.ShapeDtypeStruct((B, P), jnp.float32),
        in_specs=[vmem, vmem, vmem],
        out_specs=vmem,
    )(x.astype(jnp.bfloat16), w_stack, slab)

    return out_padded[:, :out_dim]


def init_params(key, in_dim, h1, h2, out_dim):
    ks = jax.random.split(key, 3)

    def lin(k, fan_in, fan_out):
        kw, kb = jax.random.split(k)
        bound = 1.0 / jnp.sqrt(fan_in)
        w = jax.random.uniform(kw, (fan_in, fan_out), jnp.float32, -bound, bound)
        b = jax.random.uniform(kb, (1, fan_out), jnp.float32, -bound, bound)
        return w, b

    w1, b1 = lin(ks[0], in_dim, h1)
    w2, b2 = lin(ks[1], h1, h2)
    w3, b3 = lin(ks[2], h2, out_dim)
    return dict(
        w1=w1, b1=b1,
        g1=jnp.ones((1, h1), jnp.float32), be1=jnp.zeros((1, h1), jnp.float32),
        w2=w2, b2=b2,
        g2=jnp.ones((1, h2), jnp.float32), be2=jnp.zeros((1, h2), jnp.float32),
        w3=w3, b3=b3,
    )


def reference_forward(x, p):
    # Pure-JAX f32 reference with the original two-pass BN and the Linear
    # biases kept (BN cancels them mathematically).
    def bn(h, g, b):
        m = jnp.mean(h, axis=0, keepdims=True)
        v = jnp.mean((h - m) ** 2, axis=0, keepdims=True)
        return (h - m) / jnp.sqrt(v + EPS) * g + b

    h = jax.nn.relu(bn(x @ p["w1"] + p["b1"], p["g1"], p["be1"]))
    h = jax.nn.relu(bn(h @ p["w2"] + p["b2"], p["g2"], p["be2"]))
    return h @ p["w3"] + p["b3"]


if __name__ == "__main__":
    B, in_dim, h1, h2, out_dim = 8, 32, 64, 32, 10
    key = jax.random.PRNGKey(0)
    kx, kp = jax.random.split(key)
    x = jax.random.normal(kx, (B, in_dim), jnp.float32)
    params = init_params(kp, in_dim, h1, h2, out_dim)

    # One-time packing, off the per-call hot path.
    w_stack, slab = prepare_params(params, in_dim, h1, h2, out_dim)

    out = net_forward(x, w_stack, slab, out_dim=out_dim)
    out = jax.block_until_ready(out)

    ref = reference_forward(x, params)
    assert out.shape == (B, out_dim)
    # Tolerance reflects bf16 MXU operands (f32 accumulate, f32 BN/ReLU).
    err = float(jnp.max(jnp.abs(out - ref)))
    assert err < 5e-2, err
    print("KERNEL_OK")
</pallas_src>

<mosaic_0001>
module attributes {stable_mosaic.version = 11 : i64} {
  func.func @mlp_kernel(%arg0: memref<8x32xbf16, #tpu.memory_space<vmem>>, %arg1: memref<3x128x128xbf16, #tpu.memory_space<vmem>>, %arg2: memref<8x128xf32, #tpu.memory_space<vmem>>, %arg3: memref<8x128xf32, #tpu.memory_space<vmem>>) attributes {dimension_semantics = [], scalar_prefetch = 0 : i64, scratch_operands = 0 : i64, tpu.core_type = #tpu.core_type<tc>} {
    %c0 = arith.constant 0 : index
    %c0_0 = arith.constant 0 : index
    %0 = vector.load %arg0[%c0, %c0_0] : memref<8x32xbf16, #tpu.memory_space<vmem>>, vector<8x32xbf16>
    %c0_1 = arith.constant 0 : index
    %c0_2 = arith.constant 0 : index
    %c0_3 = arith.constant 0 : index
    %1 = vector.load %arg1[%c0_1, %c0_2, %c0_3] : memref<3x128x128xbf16, #tpu.memory_space<vmem>>, vector<1x32x128xbf16>
    %2 = vector.shape_cast %1 : vector<1x32x128xbf16> to vector<32x128xbf16>
    %cst = arith.constant dense<0.000000e+00> : vector<8x128xf32>
    %3 = tpu.matmul %0, %2, %cst {dimension_numbers = #tpu.dot_dimension_numbers<[1], [0], [0], [1], [0, 0, 1, 1], [], []>} : vector<8x32xbf16>, vector<32x128xbf16>, vector<8x128xf32> -> vector<8x128xf32>
    %c0_4 = arith.constant 0 : index
    %c0_5 = arith.constant 0 : index
    %4 = vector.load %arg2[%c0_4, %c0_5] : memref<8x128xf32, #tpu.memory_space<vmem>>, vector<1x128xf32>
    %c1 = arith.constant 1 : index
    %c0_6 = arith.constant 0 : index
    %5 = vector.load %arg2[%c1, %c0_6] : memref<8x128xf32, #tpu.memory_space<vmem>>, vector<1x128xf32>
    %cst_7 = arith.constant dense<0.000000e+00> : vector<128xf32>
    %6 = vector.multi_reduction <add>, %3, %cst_7 [0] : vector<8x128xf32> to vector<128xf32>
    %7 = vector.shape_cast %6 : vector<128xf32> to vector<1x128xf32>
    %8 = arith.mulf %3, %3 : vector<8x128xf32>
    %cst_8 = arith.constant dense<0.000000e+00> : vector<128xf32>
    %9 = vector.multi_reduction <add>, %8, %cst_8 [0] : vector<8x128xf32> to vector<128xf32>
    %10 = vector.shape_cast %9 : vector<128xf32> to vector<1x128xf32>
    %cst_9 = arith.constant 1.250000e-01 : f32
    %11 = vector.broadcast %cst_9 : f32 to vector<1x128xf32>
    %12 = arith.mulf %7, %11 : vector<1x128xf32>
    %cst_10 = arith.constant 1.250000e-01 : f32
    %13 = vector.broadcast %cst_10 : f32 to vector<1x128xf32>
    %14 = arith.mulf %10, %13 : vector<1x128xf32>
    %15 = arith.mulf %12, %12 : vector<1x128xf32>
    %16 = arith.subf %14, %15 : vector<1x128xf32>
    %cst_11 = arith.constant 0.000000e+00 : f32
    %17 = vector.broadcast %cst_11 : f32 to vector<1x128xf32>
    %18 = arith.maximumf %16, %17 : vector<1x128xf32>
    %cst_12 = arith.constant 9.99999974E-6 : f32
    %19 = vector.broadcast %cst_12 : f32 to vector<1x128xf32>
    %20 = arith.addf %18, %19 : vector<1x128xf32>
    %21 = math.rsqrt %20 : vector<1x128xf32>
    %22 = arith.mulf %21, %4 : vector<1x128xf32>
    %23 = vector.broadcast %12 : vector<1x128xf32> to vector<8x128xf32>
    %24 = arith.subf %3, %23 : vector<8x128xf32>
    %25 = vector.broadcast %22 : vector<1x128xf32> to vector<8x128xf32>
    %26 = arith.mulf %24, %25 : vector<8x128xf32>
    %27 = vector.broadcast %5 : vector<1x128xf32> to vector<8x128xf32>
    %28 = arith.addf %26, %27 : vector<8x128xf32>
    %cst_13 = arith.constant 0.000000e+00 : f32
    %29 = vector.broadcast %cst_13 : f32 to vector<8x128xf32>
    %30 = arith.maximumf %28, %29 : vector<8x128xf32>
    %31 = arith.truncf %30 : vector<8x128xf32> to vector<8x128xbf16>
    %c1_14 = arith.constant 1 : index
    %c0_15 = arith.constant 0 : index
    %c0_16 = arith.constant 0 : index
    %32 = vector.load %arg1[%c1_14, %c0_15, %c0_16] : memref<3x128x128xbf16, #tpu.memory_space<vmem>>, vector<1x128x128xbf16>
    %33 = vector.shape_cast %32 : vector<1x128x128xbf16> to vector<128x128xbf16>
    %cst_17 = arith.constant dense<0.000000e+00> : vector<8x128xf32>
    %34 = tpu.matmul %31, %33, %cst_17 {dimension_numbers = #tpu.dot_dimension_numbers<[1], [0], [0], [1], [0, 0, 1, 1], [], []>} : vector<8x128xbf16>, vector<128x128xbf16>, vector<8x128xf32> -> vector<8x128xf32>
    %c2 = arith.constant 2 : index
    %c0_18 = arith.constant 0 : index
    %35 = vector.load %arg2[%c2, %c0_18] : memref<8x128xf32, #tpu.memory_space<vmem>>, vector<1x128xf32>
    %c3 = arith.constant 3 : index
    %c0_19 = arith.constant 0 : index
    %36 = vector.load %arg2[%c3, %c0_19] : memref<8x128xf32, #tpu.memory_space<vmem>>, vector<1x128xf32>
    %cst_20 = arith.constant dense<0.000000e+00> : vector<128xf32>
    %37 = vector.multi_reduction <add>, %34, %cst_20 [0] : vector<8x128xf32> to vector<128xf32>
    %38 = vector.shape_cast %37 : vector<128xf32> to vector<1x128xf32>
    %39 = arith.mulf %34, %34 : vector<8x128xf32>
    %cst_21 = arith.constant dense<0.000000e+00> : vector<128xf32>
    %40 = vector.multi_reduction <add>, %39, %cst_21 [0] : vector<8x128xf32> to vector<128xf32>
    %41 = vector.shape_cast %40 : vector<128xf32> to vector<1x128xf32>
    %cst_22 = arith.constant 1.250000e-01 : f32
    %42 = vector.broadcast %cst_22 : f32 to vector<1x128xf32>
    %43 = arith.mulf %38, %42 : vector<1x128xf32>
    %cst_23 = arith.constant 1.250000e-01 : f32
    %44 = vector.broadcast %cst_23 : f32 to vector<1x128xf32>
    %45 = arith.mulf %41, %44 : vector<1x128xf32>
    %46 = arith.mulf %43, %43 : vector<1x128xf32>
    %47 = arith.subf %45, %46 : vector<1x128xf32>
    %cst_24 = arith.constant 0.000000e+00 : f32
    %48 = vector.broadcast %cst_24 : f32 to vector<1x128xf32>
    %49 = arith.maximumf %47, %48 : vector<1x128xf32>
    %cst_25 = arith.constant 9.99999974E-6 : f32
    %50 = vector.broadcast %cst_25 : f32 to vector<1x128xf32>
    %51 = arith.addf %49, %50 : vector<1x128xf32>
    %52 = math.rsqrt %51 : vector<1x128xf32>
    %53 = arith.mulf %52, %35 : vector<1x128xf32>
    %54 = vector.broadcast %43 : vector<1x128xf32> to vector<8x128xf32>
    %55 = arith.subf %34, %54 : vector<8x128xf32>
    %56 = vector.broadcast %53 : vector<1x128xf32> to vector<8x128xf32>
    %57 = arith.mulf %55, %56 : vector<8x128xf32>
    %58 = vector.broadcast %36 : vector<1x128xf32> to vector<8x128xf32>
    %59 = arith.addf %57, %58 : vector<8x128xf32>
    %cst_26 = arith.constant 0.000000e+00 : f32
    %60 = vector.broadcast %cst_26 : f32 to vector<8x128xf32>
    %61 = arith.maximumf %59, %60 : vector<8x128xf32>
    %62 = arith.truncf %61 : vector<8x128xf32> to vector<8x128xbf16>
    %c2_27 = arith.constant 2 : index
    %c0_28 = arith.constant 0 : index
    %c0_29 = arith.constant 0 : index
    %63 = vector.load %arg1[%c2_27, %c0_28, %c0_29] : memref<3x128x128xbf16, #tpu.memory_space<vmem>>, vector<1x128x128xbf16>
    %64 = vector.shape_cast %63 : vector<1x128x128xbf16> to vector<128x128xbf16>
    %cst_30 = arith.constant dense<0.000000e+00> : vector<8x128xf32>
    %65 = tpu.matmul %62, %64, %cst_30 {dimension_numbers = #tpu.dot_dimension_numbers<[1], [0], [0], [1], [0, 0, 1, 1], [], []>} : vector<8x128xbf16>, vector<128x128xbf16>, vector<8x128xf32> -> vector<8x128xf32>
    %c4 = arith.constant 4 : index
    %c0_31 = arith.constant 0 : index
    %66 = vector.load %arg2[%c4, %c0_31] : memref<8x128xf32, #tpu.memory_space<vmem>>, vector<1x128xf32>
    %67 = vector.broadcast %66 : vector<1x128xf32> to vector<8x128xf32>
    %68 = arith.addf %65, %67 : vector<8x128xf32>
    %c0_32 = arith.constant 0 : index
    %c0_33 = arith.constant 0 : index
    %69 = vector.load %arg3[%c0_32, %c0_33] : memref<8x128xf32, #tpu.memory_space<vmem>>, vector<8x128xf32>
    tpu.vector_store %arg3[%c0_32, %c0_33], %68 {strides = array<i32>} : memref<8x128xf32, #tpu.memory_space<vmem>>, vector<8x128xf32>,
    return
  }
}

</mosaic_0001>

<llo_original>
// kernel: net_forward.1
$region0: #{net_forward.1}
  #allocation0 [shape = 'u32[]', space=smem, size = 0x4, offset = 0x4, fixed_abs, tag = 'smem constant byte address 0x4 - core index']
  #allocation1 [shape = 'u32[72,128]{1,0:T(1,128)}', space=vmem, size = 0x9000, scoped, tag = 'internal scratch']
  %s0 = inlined_call_operand.vmem [shape: bf16[8,32], index: 0, kind: input, shape index: {}]
  %s1 = inlined_call_operand.hbm [shape: bf16[3,128,128], index: 1, kind: input, shape index: {}]
  %s2 = inlined_call_operand.vmem [shape: f32[8,128], index: 2, kind: input, shape index: {}]
  %s3 = inlined_call_operand.hbm [shape: f32[8,128], index: 3, kind: output, shape index: {}]
  %s4 = sld [smem:[#allocation0]]
  $region26: #{net_forward.1} parent=0
    _
  %s6 = ssub.s32 1, %s4
  %s7 = scalar_select 0, %s6, %s4
  $region1: #{net_forward.1} parent=0
    #allocation2 [shape = 'u8[98304]{0}', space=vmem, size = 0x18000, scoped, tag = 'input window, operand 1, single buffered']
    #allocation3 [shape = 's32[1]{0}', space=sflag, size = 0x4, scoped, tag = 'scoped memory for net_forward.1']
    #allocation4 [shape = 's32[1]{0}', space=sflag, size = 0x4, scoped, tag = 'scoped memory for net_forward.1']
    #allocation5 [shape = 'u8[4096]{0}', space=vmem, size = 0x1000, scoped, tag = 'output window, operand 0, single buffered']
    %8 = vsyncpa [#allocation3], 0
    %9 = vsyncpa [#allocation4], 0
    // Predicated region
    $region2: #{net_forward.1} parent=1 // pred_check
      _
    $region3: #{net_forward.1} parent=1 // pred_check_branch
      %11 = sbr.rel (0) target = $region5
    $region4: #{net_forward.1} parent=1 // pred_region
      _
    $region5: #{net_forward.1} parent=1 // pred_fallthru
      _
    // Predicated region
    $region6: #{net_forward.1} parent=1 // pred_check
      _
    $region7: #{net_forward.1} parent=1 // pred_check_branch
      %13 = sbr.rel (0) target = $region9
    $region8: #{net_forward.1} parent=1 // pred_region
      %15 = vsyncadd [#allocation3], 0
      %s16 = sshll.u32 %s1, 4
      %s17 = int_to_ptr.hbm [resolvable:$true] %s16
      %s18 = sshll.u32 [#allocation2], 4
      %s19 = int_to_ptr.vmem [resolvable:$true] %s18
      %24 = dma.hbm_to_vmem [thread:$0]  %s17, 3072, %s19, [#allocation3], 64, 64, 4
    $region9: #{net_forward.1} parent=1 // pred_fallthru
      _
    // Predicated region
    $region10: #{net_forward.1} parent=1 // pred_check
      _
    $region11: #{net_forward.1} parent=1 // pred_check_branch
      %26 = sbr.rel (0) target = $region13
    $region12: #{net_forward.1} parent=1 // pred_region
      _
    $region13: #{net_forward.1} parent=1 // pred_fallthru
      _
    // Predicated region
    $region14: #{net_forward.1} parent=1 // pred_check
      _
    $region15: #{net_forward.1} parent=1 // pred_check_branch
      %28 = sbr.rel (0) target = $region17
    $region16: #{net_forward.1} parent=1 // pred_region
      %30 = dma.done [#allocation3], 3072
    $region17: #{net_forward.1} parent=1 // pred_fallthru
      _
    %v32 = vld [vmem:[%s0] sm:$0xf]
    %v33 = vld [vmem:[#allocation2] sm:$0xf]
    %v34 = vld [vmem:[#allocation2 + $0x4] sm:$0xf]
    %v35 = vld [vmem:[#allocation2 + $0x8] sm:$0xf]
    %v36 = vld [vmem:[#allocation2 + $0xc] sm:$0xf]
    %v41 = vunpack.c.l.b16 %v33
    %v42 = vunpack.c.l.b16 %v34
    %v43 = vunpack.c.l.b16 %v35
    %v44 = vunpack.c.l.b16 %v36
    %v45 = vpack.c.b16 %v42, %v41
    %v46 = vpack.c.b16 %v44, %v43
    %vm49 = vcmask 261120
    %v51 = vsel %vm49, %v32, 0
    %53 = vmatpush.bf16.msra.mxu0 0
    %54 = vmatpush.bf16.msra.mxu0 0
    %55 = vmatpush.bf16.msra.mxu0 0
    %56 = vmatpush.bf16.msra.mxu0 0
    %57 = vmatpush.bf16.msra.mxu0 0
    %58 = vmatpush.bf16.msra.mxu0 0
    %59 = vmatpush.bf16.msra.mxu0 %v46
    %60 = vmatpush.bf16.msra.mxu0 %v45
    %61 = vmatmul.bf16.gmra.mxu0 %v51
    %v62 = vpop.f32.mrf.mxu0
    %v63 = vadd.f32 0.0, %v62
    %v64 = vpop.f32.mrf.mxu0
    %65 = vdwg.mxu0
    %v66 = vld [vmem:[%s2] sm:$0x1]
    %v67 = vld [vmem:[%s2 + $0x1] sm:$0x1]
    %v68 = vrot.slane %v63, 4
    %v69 = vadd.f32 %v63, %v68
    %v70 = vrot.slane %v69, 2
    %v71 = vadd.f32 %v69, %v70
    %v72 = vrot.slane %v71, 1
    %v73 = vadd.f32 %v71, %v72
    %v74 = vmul.f32 %v63, %v63
    %v75 = vrot.slane %v74, 4
    %v76 = vadd.f32 %v74, %v75
    %v77 = vrot.slane %v76, 2
    %v78 = vadd.f32 %v76, %v77
    %v79 = vrot.slane %v78, 1
    %v80 = vadd.f32 %v78, %v79
    %v81 = vmul.f32 %v73, 0.125
    %v82 = vmul.f32 %v80, 0.125
    %v83 = vmul.f32 %v81, %v81
    %v84 = vsub.f32 %v82, %v83
    %v85 = vmax.f32 %v84, 0.0
    %v86 = vadd.f32 %v85, 1e-05
    %v87 = vrsqrt.pop %v86
    %v88 = vmul.f32 %v87, %v86
    %v89 = vmul.f32 %v88, %v87
    %v90 = vmul.f32 0.5, %v89
    %v91 = vsub.f32 1.5, %v90
    %v92 = vmul.f32 %v87, %v91
    %vm93 = vweird.f32 %v86
    %vm94 = vweird.f32 %v87
    %vm95 = vmor %vm93, %vm94
    %v96 = vsel %vm95, %v87, %v92
    %v97 = vmul.f32 %v96, %v66
    %v98 = vsub.f32 %v63, %v81
    %v99 = vperm.slane %v97, 0
    %v100 = vmul.f32 %v98, %v99
    %v101 = vperm.slane %v67, 0
    %v102 = vadd.f32 %v100, %v101
    %v103 = vmax.f32 %v102, 0.0
    %v104 = vpack.c.bf16 %v103, %v103
    %s105 = scalar_lea.vmem [#allocation2], 64
    %v106 = vld [vmem:[%s105] sm:$0xf]
    %v107 = vld [vmem:[%s105 + $0x4] sm:$0xf]
    %v108 = vld [vmem:[%s105 + $0x8] sm:$0xf]
    %v109 = vld [vmem:[%s105 + $0xc] sm:$0xf]
    %v110 = vld [vmem:[%s105 + $0x10] sm:$0xf]
    %v111 = vld [vmem:[%s105 + $0x14] sm:$0xf]
    %v112 = vld [vmem:[%s105 + $0x18] sm:$0xf]
    %v113 = vld [vmem:[%s105 + $0x1c] sm:$0xf]
    %v114 = vld [vmem:[%s105 + $0x20] sm:$0xf]
    %v115 = vld [vmem:[%s105 + $0x24] sm:$0xf]
    %v116 = vld [vmem:[%s105 + $0x28] sm:$0xf]
    %v117 = vld [vmem:[%s105 + $0x2c] sm:$0xf]
    %v118 = vld [vmem:[%s105 + $0x30] sm:$0xf]
    %v119 = vld [vmem:[%s105 + $0x34] sm:$0xf]
    %v120 = vld [vmem:[%s105 + $0x38] sm:$0xf]
    %v121 = vld [vmem:[%s105 + $0x3c] sm:$0xf]
    %v138 = vunpack.c.l.b16 %v106
    %v139 = vunpack.c.l.b16 %v107
    %v140 = vunpack.c.l.b16 %v108
    %v141 = vunpack.c.l.b16 %v109
    %v142 = vunpack.c.l.b16 %v110
    %v143 = vunpack.c.l.b16 %v111
    %v144 = vunpack.c.l.b16 %v112
    %v145 = vunpack.c.l.b16 %v113
    %v146 = vunpack.c.l.b16 %v114
    %v147 = vunpack.c.l.b16 %v115
    %v148 = vunpack.c.l.b16 %v116
    %v149 = vunpack.c.l.b16 %v117
    %v150 = vunpack.c.l.b16 %v118
    %v151 = vunpack.c.l.b16 %v119
    %v152 = vunpack.c.l.b16 %v120
    %v153 = vunpack.c.l.b16 %v121
    %v154 = vpack.c.b16 %v139, %v138
    %v155 = vpack.c.b16 %v141, %v140
    %v156 = vpack.c.b16 %v143, %v142
    %v157 = vpack.c.b16 %v145, %v144
    %v158 = vpack.c.b16 %v147, %v146
    %v159 = vpack.c.b16 %v149, %v148
    %v160 = vpack.c.b16 %v151, %v150
    %v161 = vpack.c.b16 %v153, %v152
    %170 = vmatpush.bf16.msra.mxu0 %v161
    %171 = vmatpush.bf16.msra.mxu0 %v160
    %172 = vmatpush.bf16.msra.mxu0 %v159
    %173 = vmatpush.bf16.msra.mxu0 %v158
    %174 = vmatpush.bf16.msra.mxu0 %v157
    %175 = vmatpush.bf16.msra.mxu0 %v156
    %176 = vmatpush.bf16.msra.mxu0 %v155
    %177 = vmatpush.bf16.msra.mxu0 %v154
    %178 = vmatmul.bf16.gmra.mxu0 %v104
    %v179 = vpop.f32.mrf.mxu0
    %v180 = vadd.f32 0.0, %v179
    %v181 = vpop.f32.mrf.mxu0
    %182 = vdwg.mxu0
    %v183 = vld [vmem:[%s2 + $0x2] sm:$0x1]
    %v184 = vld [vmem:[%s2 + $0x3] sm:$0x1]
    %v185 = vrot.slane %v180, 4
    %v186 = vadd.f32 %v180, %v185
    %v187 = vrot.slane %v186, 2
    %v188 = vadd.f32 %v186, %v187
    %v189 = vrot.slane %v188, 1
    %v190 = vadd.f32 %v188, %v189
    %v191 = vmul.f32 %v180, %v180
    %v192 = vrot.slane %v191, 4
    %v193 = vadd.f32 %v191, %v192
    %v194 = vrot.slane %v193, 2
    %v195 = vadd.f32 %v193, %v194
    %v196 = vrot.slane %v195, 1
    %v197 = vadd.f32 %v195, %v196
    %v198 = vmul.f32 %v190, 0.125
    %v199 = vmul.f32 %v197, 0.125
    %v200 = vmul.f32 %v198, %v198
    %v201 = vsub.f32 %v199, %v200
    %v202 = vmax.f32 %v201, 0.0
    %v203 = vadd.f32 %v202, 1e-05
    %v204 = vrsqrt.pop %v203
    %v205 = vmul.f32 %v204, %v203
    %v206 = vmul.f32 %v205, %v204
    %v207 = vmul.f32 0.5, %v206
    %v208 = vsub.f32 1.5, %v207
    %v209 = vmul.f32 %v204, %v208
    %vm210 = vweird.f32 %v203
    %vm211 = vweird.f32 %v204
    %vm212 = vmor %vm210, %vm211
    %v213 = vsel %vm212, %v204, %v209
    %v214 = vmul.f32 %v213, %v183
    %v215 = vsub.f32 %v180, %v198
    %v216 = vperm.slane %v214, 0
    %v217 = vmul.f32 %v215, %v216
    %v218 = vperm.slane %v184, 0
    %v219 = vadd.f32 %v217, %v218
    %v220 = vmax.f32 %v219, 0.0
    %v221 = vpack.c.bf16 %v220, %v220
    %s222 = scalar_lea.vmem [#allocation2], 128
    %v223 = vld [vmem:[%s222] sm:$0xf]
    %v224 = vld [vmem:[%s222 + $0x4] sm:$0xf]
    %v225 = vld [vmem:[%s222 + $0x8] sm:$0xf]
    %v226 = vld [vmem:[%s222 + $0xc] sm:$0xf]
    %v227 = vld [vmem:[%s222 + $0x10] sm:$0xf]
    %v228 = vld [vmem:[%s222 + $0x14] sm:$0xf]
    %v229 = vld [vmem:[%s222 + $0x18] sm:$0xf]
    %v230 = vld [vmem:[%s222 + $0x1c] sm:$0xf]
    %v231 = vld [vmem:[%s222 + $0x20] sm:$0xf]
    %v232 = vld [vmem:[%s222 + $0x24] sm:$0xf]
    %v233 = vld [vmem:[%s222 + $0x28] sm:$0xf]
    %v234 = vld [vmem:[%s222 + $0x2c] sm:$0xf]
    %v235 = vld [vmem:[%s222 + $0x30] sm:$0xf]
    %v236 = vld [vmem:[%s222 + $0x34] sm:$0xf]
    %v237 = vld [vmem:[%s222 + $0x38] sm:$0xf]
    %v238 = vld [vmem:[%s222 + $0x3c] sm:$0xf]
    %v239 = vld [vmem:[%s2 + $0x4] sm:$0x1]
    %v240 = vperm.slane %v239, 0
    %v257 = vunpack.c.l.b16 %v223
    %v258 = vunpack.c.l.b16 %v224
    %v259 = vunpack.c.l.b16 %v225
    %v260 = vunpack.c.l.b16 %v226
    %v261 = vunpack.c.l.b16 %v227
    %v262 = vunpack.c.l.b16 %v228
    %v263 = vunpack.c.l.b16 %v229
    %v264 = vunpack.c.l.b16 %v230
    %v265 = vunpack.c.l.b16 %v231
    %v266 = vunpack.c.l.b16 %v232
    %v267 = vunpack.c.l.b16 %v233
    %v268 = vunpack.c.l.b16 %v234
    %v269 = vunpack.c.l.b16 %v235
    %v270 = vunpack.c.l.b16 %v236
    %v271 = vunpack.c.l.b16 %v237
    %v272 = vunpack.c.l.b16 %v238
    %v273 = vpack.c.b16 %v258, %v257
    %v274 = vpack.c.b16 %v260, %v259
    %v275 = vpack.c.b16 %v262, %v261
    %v276 = vpack.c.b16 %v264, %v263
    %v277 = vpack.c.b16 %v266, %v265
    %v278 = vpack.c.b16 %v268, %v267
    %v279 = vpack.c.b16 %v270, %v269
    %v280 = vpack.c.b16 %v272, %v271
    %289 = vmatpush.bf16.msra.mxu0 %v280
    %290 = vmatpush.bf16.msra.mxu0 %v279
    %291 = vmatpush.bf16.msra.mxu0 %v278
    %292 = vmatpush.bf16.msra.mxu0 %v277
    %293 = vmatpush.bf16.msra.mxu0 %v276
    %294 = vmatpush.bf16.msra.mxu0 %v275
    %295 = vmatpush.bf16.msra.mxu0 %v274
    %296 = vmatpush.bf16.msra.mxu0 %v273
    %297 = vmatmul.bf16.gmra.mxu0 %v221
    %v298 = vpop.f32.mrf.mxu0
    %v299 = vadd.f32 %v240, %v298
    %v300 = vpop.f32.mrf.mxu0
    %301 = vdwg.mxu0
    %302 = vst [vmem:[#allocation5] sm:$0xff] %v299
    // Predicated region
    $region18: #{net_forward.1} parent=1 // pred_check
      _
    $region19: #{net_forward.1} parent=1 // pred_check_branch
      %304 = sbr.rel (0) target = $region21
    $region20: #{net_forward.1} parent=1 // pred_region
      %306 = vsyncadd [#allocation4], 0
      %s308 = sshll.u32 [#allocation5], 4
      %s309 = int_to_ptr.vmem [resolvable:$true] %s308
      %s310 = sshll.u32 %s3, 4
      %s311 = int_to_ptr.hbm [resolvable:$true] %s310
      %313 = dma.vmem_to_hbm [thread:$0]  %s309, 128, %s311, [#allocation4]
    $region21: #{net_forward.1} parent=1 // pred_fallthru
      _
    // Predicated region
    $region22: #{net_forward.1} parent=1 // pred_check
      _
    $region23: #{net_forward.1} parent=1 // pred_check_branch
      %315 = sbr.rel (0) target = $region25
    $region24: #{net_forward.1} parent=1 // pred_region
      %317 = dma.done [#allocation4], 128
    $region25: #{net_forward.1} parent=1 // pred_fallthru
      _
    %318 = vsyncpa [#allocation3], 1
    %319 = vsyncpa [#allocation4], 1

</llo_original>
